<compile_context>
chip_gen: v7x
topology: tpu7x:2x2x1
jax: 0.10.0
libtpu: 0.0.40
codegen_flags: <defaults>
</compile_context>

<pallas_src>
import functools

import jax
import jax.numpy as jnp
from jax.experimental import pallas as pl
from jax.experimental.pallas import tpu as pltpu

_IN_EPS = 1e-5


# ----------------------------- Pallas kernels ------------------------------


def _conv_in_math(p, w, b, eps, apply_relu):
    # p: (C_in*K*K, H*W)  w: (C_out, C_in*K*K)  b: (C_out, 1)
    y = jnp.dot(w, p, preferred_element_type=jnp.float32) + b        # MXU matmul + bias
    mean = jnp.mean(y, axis=-1, keepdims=True)                       # per-channel spatial mean
    var = jnp.mean(jnp.square(y - mean), axis=-1, keepdims=True)     # biased var (InstanceNorm2d)
    y = (y - mean) * jax.lax.rsqrt(var + eps)
    if apply_relu:
        y = jnp.maximum(y, 0.0)
    return y


def conv_in_kernel(p_ref, w_ref, b_ref, o_ref, *, eps, apply_relu):
    """Fused Conv(as one matmul) + bias + InstanceNorm + optional ReLU, one batch element."""
    o_ref[0] = _conv_in_math(p_ref[0], w_ref[...], b_ref[...], eps, apply_relu)


def conv_in_residual_kernel(p_ref, w_ref, b_ref, r_ref, o_ref, *, eps):
    """Fused Conv + bias + InstanceNorm + residual add (tail of a ResidualBlock)."""
    o_ref[0] = r_ref[0] + _conv_in_math(p_ref[0], w_ref[...], b_ref[...], eps, False)


# ------------------------------- wrappers ----------------------------------


def _im2col(x_pad, k, stride, h_out, w_out):
    """(N, C, Hp, Wp) -> (N, C*K*K, H_out*W_out) with (c, kh, kw) row order,
    matching torch Conv2d weight.reshape(C_out, C_in*K*K)."""
    n, c, _, _ = x_pad.shape
    cols = []
    for kh in range(k):
        for kw in range(k):
            cols.append(
                x_pad[:, :,
                      kh: kh + stride * (h_out - 1) + 1: stride,
                      kw: kw + stride * (w_out - 1) + 1: stride])
    p = jnp.stack(cols, axis=2)                       # (N, C, K*K, H_out, W_out)
    return p.reshape(n, c * k * k, h_out * w_out)


def conv_in_layer(x, w, b, *, stride, pad, pad_mode, relu, residual=None, eps=_IN_EPS):
    """Conv2d(KxK, stride, pad) + InstanceNorm2d + (ReLU | residual add). NCHW in/out."""
    n, c_in, h, wid = x.shape
    c_out, _, k, _ = w.shape

    if pad > 0:
        x_pad = jnp.pad(x, ((0, 0), (0, 0), (pad, pad), (pad, pad)), mode=pad_mode)
    else:
        x_pad = x
    hp, wp = h + 2 * pad, wid + 2 * pad
    h_out = (hp - k) // stride + 1
    w_out = (wp - k) // stride + 1
    hw = h_out * w_out
    ck = c_in * k * k

    p = _im2col(x_pad.astype(jnp.float32), k, stride, h_out, w_out)   # (N, CK, HW)
    w2 = w.reshape(c_out, ck).astype(jnp.float32)                     # (C_out, CK)
    b2 = b.reshape(c_out, 1).astype(jnp.float32)                      # (C_out, 1)

    in_specs = [
        pl.BlockSpec((1, ck, hw), lambda i: (i, 0, 0)),   # patches: per-batch block
        pl.BlockSpec((c_out, ck), lambda i: (0, 0)),      # weights: resident across grid
        pl.BlockSpec((c_out, 1), lambda i: (0, 0)),       # bias:    resident across grid
    ]
    args = [p, w2, b2]

    if residual is None:
        kernel = functools.partial(conv_in_kernel, eps=eps, apply_relu=relu)
    else:
        r2 = residual.reshape(n, c_out, hw).astype(jnp.float32)
        in_specs.append(pl.BlockSpec((1, c_out, hw), lambda i: (i, 0, 0)))
        args.append(r2)
        kernel = functools.partial(conv_in_residual_kernel, eps=eps)

    out = pl.pallas_call(
        kernel,
        out_shape=jax.ShapeDtypeStruct((n, c_out, hw), jnp.float32),
        grid=(n,),
        in_specs=in_specs,
        out_specs=pl.BlockSpec((1, c_out, hw), lambda i: (i, 0, 0)),
        compiler_params=pltpu.CompilerParams(dimension_semantics=("parallel",)),
    )(*args)

    return out.reshape(n, c_out, h_out, w_out)


def encoder_forward(x, params, *, n_blocks):
    """UNIT Encoder: stem + two stride-2 downsamples + n_blocks residual blocks."""
    h = conv_in_layer(x, params["w_stem"], params["b_stem"],
                      stride=1, pad=3, pad_mode="reflect", relu=True)
    h = conv_in_layer(h, params["w_down1"], params["b_down1"],
                      stride=2, pad=1, pad_mode="constant", relu=True)
    h = conv_in_layer(h, params["w_down2"], params["b_down2"],
                      stride=2, pad=1, pad_mode="constant", relu=True)
    for i in range(n_blocks):
        w1, b1, w2, b2 = params[f"resblock_{i}"]
        t = conv_in_layer(h, w1, b1, stride=1, pad=1, pad_mode="reflect", relu=True)
        h = conv_in_layer(t, w2, b2, stride=1, pad=1, pad_mode="reflect",
                          relu=False, residual=h)
    return h


# --------------------------- pure-JAX reference -----------------------------


def _ref_conv(x, w, b, stride, pad, pad_mode):
    if pad > 0 and pad_mode == "reflect":
        x = jnp.pad(x, ((0, 0), (0, 0), (pad, pad), (pad, pad)), mode="reflect")
        conv_pad = [(0, 0), (0, 0)]
    else:
        conv_pad = [(pad, pad), (pad, pad)]
    y = jax.lax.conv_general_dilated(
        x, w, window_strides=(stride, stride), padding=conv_pad,
        dimension_numbers=("NCHW", "OIHW", "NCHW"))
    return y + b[None, :, None, None]


def _ref_instance_norm(x, eps=_IN_EPS):
    mean = x.mean(axis=(2, 3), keepdims=True)
    var = jnp.square(x - mean).mean(axis=(2, 3), keepdims=True)
    return (x - mean) * jax.lax.rsqrt(var + eps)


def _ref_encoder(x, params, *, n_blocks):
    h = jnp.maximum(_ref_instance_norm(
        _ref_conv(x, params["w_stem"], params["b_stem"], 1, 3, "reflect")), 0.0)
    h = jnp.maximum(_ref_instance_norm(
        _ref_conv(h, params["w_down1"], params["b_down1"], 2, 1, "constant")), 0.0)
    h = jnp.maximum(_ref_instance_norm(
        _ref_conv(h, params["w_down2"], params["b_down2"], 2, 1, "constant")), 0.0)
    for i in range(n_blocks):
        w1, b1, w2, b2 = params[f"resblock_{i}"]
        t = jnp.maximum(_ref_instance_norm(_ref_conv(h, w1, b1, 1, 1, "reflect")), 0.0)
        h = h + _ref_instance_norm(_ref_conv(t, w2, b2, 1, 1, "reflect"))
    return h


# ---------------------------------- main ------------------------------------


if __name__ == "__main__":
    # Small shapes consistent with the module: Encoder(input_nc=1, nef=16, n_blocks=3),
    # batch=2, spatial 16x16  ->  output (2, 4*nef, 4, 4).
    N, INPUT_NC, H, W = 2, 1, 16, 16
    NEF, N_BLOCKS = 16, 3

    key = jax.random.PRNGKey(0)

    def conv_params(k, c_out, c_in, ksz):
        kw, kb = jax.random.split(k)
        w = jax.random.normal(kw, (c_out, c_in, ksz, ksz), dtype=jnp.float32) * 0.1
        b = jax.random.normal(kb, (c_out,), dtype=jnp.float32) * 0.01
        return w, b

    keys = jax.random.split(key, 4 + 2 * N_BLOCKS)
    x = jax.random.normal(keys[0], (N, INPUT_NC, H, W), dtype=jnp.float32)

    params = {}
    params["w_stem"], params["b_stem"] = conv_params(keys[1], NEF, INPUT_NC, 7)
    params["w_down1"], params["b_down1"] = conv_params(keys[2], 2 * NEF, NEF, 3)
    params["w_down2"], params["b_down2"] = conv_params(keys[3], 4 * NEF, 2 * NEF, 3)
    for i in range(N_BLOCKS):
        w1, b1 = conv_params(keys[4 + 2 * i], 4 * NEF, 4 * NEF, 3)
        w2, b2 = conv_params(keys[5 + 2 * i], 4 * NEF, 4 * NEF, 3)
        params[f"resblock_{i}"] = (w1, b1, w2, b2)

    out = encoder_forward(x, params, n_blocks=N_BLOCKS)
    out = jax.block_until_ready(out)

    ref = jax.block_until_ready(_ref_encoder(x, params, n_blocks=N_BLOCKS))

    assert out.shape == (N, 4 * NEF, H // 4, W // 4), out.shape
    assert bool(jnp.all(jnp.isfinite(out))), "non-finite values in output"
    # Loose tolerance: on TPU the XLA reference conv and the Pallas MXU matmul may use
    # different f32 (multi-pass bf16) matmul paths; exact in interpret/CPU mode.
    max_err = float(jnp.max(jnp.abs(out - ref)))
    assert jnp.allclose(out, ref, atol=5e-2, rtol=5e-2), f"max abs err {max_err}"

    print("KERNEL_OK")
</pallas_src>

<mosaic_0001>
module attributes {stable_mosaic.version = 11 : i64} {
  func.func @conv_in_kernel(%arg0: i32, %arg1: memref<1x49x256xf32, #tpu.memory_space<vmem>>, %arg2: memref<16x49xf32, #tpu.memory_space<vmem>>, %arg3: memref<16x1xf32, #tpu.memory_space<vmem>>, %arg4: memref<1x16x256xf32, #tpu.memory_space<vmem>>) attributes {dimension_semantics = [#tpu.dimension_semantics<parallel>], iteration_bounds = array<i64: 2>, scalar_prefetch = 0 : i64, scratch_operands = 0 : i64, tpu.core_type = #tpu.core_type<tc>, window_params = [{transform_indices = @transform_0, window_bounds = array<i64: 1, 49, 256>}, {pipeline_mode = #tpu.pipeline_mode<synchronous>, transform_indices = @transform_1, window_bounds = array<i64: 16, 49>}, {pipeline_mode = #tpu.pipeline_mode<synchronous>, transform_indices = @transform_2, window_bounds = array<i64: 16, 1>}, {transform_indices = @transform_3, window_bounds = array<i64: 1, 16, 256>}]} {
    %c0 = arith.constant 0 : index
    %c0_0 = arith.constant 0 : index
    %c0_1 = arith.constant 0 : index
    %0 = vector.load %arg1[%c0, %c0_0, %c0_1] : memref<1x49x256xf32, #tpu.memory_space<vmem>>, vector<1x49x256xf32>
    %1 = vector.shape_cast %0 : vector<1x49x256xf32> to vector<49x256xf32>
    %c0_2 = arith.constant 0 : index
    %c0_3 = arith.constant 0 : index
    %2 = vector.load %arg2[%c0_2, %c0_3] : memref<16x49xf32, #tpu.memory_space<vmem>>, vector<16x49xf32>
    %c0_4 = arith.constant 0 : index
    %c0_5 = arith.constant 0 : index
    %3 = vector.load %arg3[%c0_4, %c0_5] : memref<16x1xf32, #tpu.memory_space<vmem>>, vector<16x1xf32>
    %cst = arith.constant dense<0.000000e+00> : vector<16x256xf32>
    %4 = tpu.matmul %2, %1, %cst {dimension_numbers = #tpu.dot_dimension_numbers<[1], [0], [0], [1], [0, 0, 1, 1], [], []>} : vector<16x49xf32>, vector<49x256xf32>, vector<16x256xf32> -> vector<16x256xf32>
    %5 = vector.broadcast %3 : vector<16x1xf32> to vector<16x256xf32>
    %6 = arith.addf %4, %5 : vector<16x256xf32>
    %cst_6 = arith.constant dense<0.000000e+00> : vector<16xf32>
    %7 = vector.multi_reduction <add>, %6, %cst_6 [1] : vector<16x256xf32> to vector<16xf32>
    %8 = vector.shape_cast %7 : vector<16xf32> to vector<16x1xf32>
    %cst_7 = arith.constant 2.560000e+02 : f32
    %9 = vector.broadcast %cst_7 : f32 to vector<16x1xf32>
    %10 = arith.divf %8, %9 : vector<16x1xf32>
    %11 = vector.broadcast %10 : vector<16x1xf32> to vector<16x256xf32>
    %12 = arith.subf %6, %11 : vector<16x256xf32>
    %13 = arith.mulf %12, %12 : vector<16x256xf32>
    %cst_8 = arith.constant dense<0.000000e+00> : vector<16xf32>
    %14 = vector.multi_reduction <add>, %13, %cst_8 [1] : vector<16x256xf32> to vector<16xf32>
    %15 = vector.shape_cast %14 : vector<16xf32> to vector<16x1xf32>
    %cst_9 = arith.constant 2.560000e+02 : f32
    %16 = vector.broadcast %cst_9 : f32 to vector<16x1xf32>
    %17 = arith.divf %15, %16 : vector<16x1xf32>
    %18 = vector.broadcast %10 : vector<16x1xf32> to vector<16x256xf32>
    %19 = arith.subf %6, %18 : vector<16x256xf32>
    %cst_10 = arith.constant 9.99999974E-6 : f32
    %20 = vector.broadcast %cst_10 : f32 to vector<16x1xf32>
    %21 = arith.addf %17, %20 : vector<16x1xf32>
    %22 = math.rsqrt %21 : vector<16x1xf32>
    %23 = vector.broadcast %22 : vector<16x1xf32> to vector<16x256xf32>
    %24 = arith.mulf %19, %23 : vector<16x256xf32>
    %cst_11 = arith.constant 0.000000e+00 : f32
    %25 = vector.broadcast %cst_11 : f32 to vector<16x256xf32>
    %26 = arith.maximumf %24, %25 : vector<16x256xf32>
    %c0_12 = arith.constant 0 : index
    %c0_13 = arith.constant 0 : index
    %c0_14 = arith.constant 0 : index
    %27 = vector.load %arg4[%c0_12, %c0_13, %c0_14] : memref<1x16x256xf32, #tpu.memory_space<vmem>>, vector<1x16x256xf32>
    %28 = vector.shape_cast %27 : vector<1x16x256xf32> to vector<16x256xf32>
    %29 = vector.shape_cast %26 : vector<16x256xf32> to vector<1x16x256xf32>
    tpu.vector_store %arg4[%c0_12, %c0_13, %c0_14], %29 {strides = array<i32>} : memref<1x16x256xf32, #tpu.memory_space<vmem>>, vector<1x16x256xf32>,
    return
  }
  func.func @transform_0(%arg0: i32) -> (i32, i32, i32) {
    %c0_i32 = arith.constant 0 : i32
    %c0_i32_0 = arith.constant 0 : i32
    %c0_i32_1 = arith.constant 0 : i32
    return %arg0, %c0_i32, %c0_i32_0 : i32, i32, i32
  }
  func.func @transform_1(%arg0: i32) -> (i32, i32) {
    %c0_i32 = arith.constant 0 : i32
    %c0_i32_0 = arith.constant 0 : i32
    %c0_i32_1 = arith.constant 0 : i32
    return %c0_i32, %c0_i32_0 : i32, i32
  }
  func.func @transform_2(%arg0: i32) -> (i32, i32) {
    %c0_i32 = arith.constant 0 : i32
    %c0_i32_0 = arith.constant 0 : i32
    %c0_i32_1 = arith.constant 0 : i32
    return %c0_i32, %c0_i32_0 : i32, i32
  }
  func.func @transform_3(%arg0: i32) -> (i32, i32, i32) {
    %c0_i32 = arith.constant 0 : i32
    %c0_i32_0 = arith.constant 0 : i32
    %c0_i32_1 = arith.constant 0 : i32
    return %arg0, %c0_i32, %c0_i32_0 : i32, i32, i32
  }
}

</mosaic_0001>

<llo_original>
// kernel: tpu_custom_call.1
$region0: #{tpu_custom_call.1}
  #allocation0 [shape = 'u32[]', space=smem, size = 0x4, offset = 0x4, fixed_abs, tag = 'smem constant byte address 0x4 - core index']
  #allocation1 [shape = 'u32[144,128]{1,0:T(1,128)}', space=vmem, size = 0x12000, scoped, tag = 'internal scratch']
  %s0 = inlined_call_operand.vmem [shape: f32[2,49,256], index: 0, kind: input, shape index: {}]
  %s1 = inlined_call_operand.vmem [shape: f32[16,49], index: 1, kind: input, shape index: {}]
  %s2 = inlined_call_operand.vmem [shape: f32[16,1], index: 2, kind: input, shape index: {}]
  %s3 = inlined_call_operand.hbm [shape: f32[2,16,256], index: 3, kind: output, shape index: {}]
  %s4 = sld [smem:[#allocation0]]
  $region45: #{tpu_custom_call.1} parent=0
    _
  %s6 = ssub.s32 1, %s4
  %s7 = scalar_select 0, %s6, %s4
  $region1: #{tpu_custom_call.1} parent=0
    #allocation2 [shape = 'u8[32768]{0}', space=vmem, size = 0x8000, scoped, tag = 'output window, operand 0']
    #allocation3 [shape = 's32[2]{0}', space=sflag, size = 0x8, scoped, tag = 'scoped memory for tpu_custom_call.1']
    %8 = vsyncpa [#allocation3], 0
    %s9 = scalar_lea.sflag [#allocation3], 1
    %10 = vsyncpa %s9, 0
    loop: start=0, step=1, limit=4
    $region2: #{tpu_custom_call.1} parent=1 // loop_pre_header
      _
    $region3: #{tpu_custom_call.1} parent=1 // loop_header
      %s12 = sphi 0, %s16
      %p13 = scmp.ge.s32.totalorder %s12, 4
      %s22 = sphi 0, %s24
      %s25 = sphi 0, %s22
      %s26 = sphi 0, %s25
      %s42 = sphi 0, %s26
      %s46 = sphi 0, %s46
      %s48 = sphi 0, %s46
      %s49 = sphi 0, %s48
      %s63 = sphi 0, %s49
      %s67 = sphi 0, %s67
      %s69 = sphi 0, %s67
      %s70 = sphi 0, %s69
      %s84 = sphi 0, %s70
      %s90 = sphi 0, %s92
      %s93 = sphi 0, %s90
      %s94 = sphi 0, %s93
      %s110 = sphi 0, %s94
    $region4: #{tpu_custom_call.1} parent=1 // loop_header_branch
      %15 = sbr.rel (%p13) target = $region8
    $region5: #{tpu_custom_call.1} parent=1 // loop_body
      %s17 = ssub.s32 %s12, 1
      %s18 = ssub.s32 %s12, 2
      %s19 = sadd.s32 %s12, 1
      %s20 = ssub.s32 %s12, %s19
      %p21 = scmp.eq.s32.totalorder %s20, 0
      %s23 = sadd.s32 %s22, 1
      %s24 = scalar_select %p21, %s22, %s23
      %p27 = pneg %p21
      %p28 = scmp.eq.s32.totalorder %s12, 1
      %p29 = por %p27, %p28
      %p30 = scmp.ne.s32.totalorder %s22, %s25
      %p31 = scmp.eq.s32.totalorder %s12, 0
      %p32 = por %p30, %p31
      %p33 = scmp.ne.s32.totalorder %s22, %s25
      %p34 = scmp.eq.s32.totalorder %s17, 1
      %p35 = por %p33, %p34
      %p36 = scmp.ne.s32.totalorder %s25, %s26
      %p37 = scmp.eq.s32.totalorder %s17, 0
      %p38 = por %p36, %p37
      %p39 = scmp.ne.s32.totalorder %s25, %s26
      %p40 = scmp.eq.s32.totalorder %s18, 1
      %p41 = por %p39, %p40
      %p43 = scmp.ne.s32.totalorder %s26, %s42
      %p44 = scmp.eq.s32.totalorder %s18, 0
      %p45 = por %p43, %p44
      %s47 = sadd.s32 %s46, 1
      %p50 = scmp.eq.s32.totalorder %s12, 1
      %p51 = scmp.ne.s32.totalorder %s46, %s48
      %p52 = scmp.eq.s32.totalorder %s12, 0
      %p53 = por %p51, %p52
      %p54 = scmp.ne.s32.totalorder %s46, %s48
      %p55 = scmp.eq.s32.totalorder %s17, 1
      %p56 = por %p54, %p55
      %p57 = scmp.ne.s32.totalorder %s48, %s49
      %p58 = scmp.eq.s32.totalorder %s17, 0
      %p59 = por %p57, %p58
      %p60 = scmp.ne.s32.totalorder %s48, %s49
      %p61 = scmp.eq.s32.totalorder %s18, 1
      %p62 = por %p60, %p61
      %p64 = scmp.ne.s32.totalorder %s49, %s63
      %p65 = scmp.eq.s32.totalorder %s18, 0
      %p66 = por %p64, %p65
      %s68 = sadd.s32 %s67, 1
      %p71 = scmp.eq.s32.totalorder %s12, 1
      %p72 = scmp.ne.s32.totalorder %s67, %s69
      %p73 = scmp.eq.s32.totalorder %s12, 0
      %p74 = por %p72, %p73
      %p75 = scmp.ne.s32.totalorder %s67, %s69
      %p76 = scmp.eq.s32.totalorder %s17, 1
      %p77 = por %p75, %p76
      %p78 = scmp.ne.s32.totalorder %s69, %s70
      %p79 = scmp.eq.s32.totalorder %s17, 0
      %p80 = por %p78, %p79
      %p81 = scmp.ne.s32.totalorder %s69, %s70
      %p82 = scmp.eq.s32.totalorder %s18, 1
      %p83 = por %p81, %p82
      %p85 = scmp.ne.s32.totalorder %s70, %s84
      %p86 = scmp.eq.s32.totalorder %s18, 0
      %p87 = por %p85, %p86
      %s88 = ssub.s32 %s12, %s19
      %p89 = scmp.eq.s32.totalorder %s88, 0
      %s91 = sadd.s32 %s90, 1
      %s92 = scalar_select %p89, %s90, %s91
      %p95 = pneg %p89
      %p96 = scmp.eq.s32.totalorder %s12, 1
      %p97 = por %p95, %p96
      %p98 = scmp.ne.s32.totalorder %s90, %s93
      %p99 = scmp.eq.s32.totalorder %s12, 0
      %p100 = por %p98, %p99
      %p101 = scmp.ne.s32.totalorder %s90, %s93
      %p102 = scmp.eq.s32.totalorder %s17, 1
      %p103 = por %p101, %p102
      %p104 = scmp.ne.s32.totalorder %s93, %s94
      %p105 = scmp.eq.s32.totalorder %s17, 0
      %p106 = por %p104, %p105
      %p107 = scmp.ne.s32.totalorder %s93, %s94
      %p108 = scmp.eq.s32.totalorder %s18, 1
      %p109 = por %p107, %p108
      %p111 = scmp.ne.s32.totalorder %s94, %s110
      %p112 = scmp.eq.s32.totalorder %s18, 0
      %p113 = por %p111, %p112
      %p114 = scmp.le.s32.totalorder 1, %s12
      %p115 = scmp.lt.s32.totalorder %s12, 3
      %p116 = pnand %p114, %p115
      %p117 = pneg %p116
      // Predicated region
      $region9: #{tpu_custom_call.1} parent=5 // pred_check
        _
      $region10: #{tpu_custom_call.1} parent=5 // pred_check_branch
        %119 = sbr.rel (%p116) target = $region12
      $region11: #{tpu_custom_call.1} parent=5 // pred_region
        %s120 = ssub.s32 %s12, 1
        // Predicated region
        $region13: #{tpu_custom_call.1} parent=11 // pred_check
          %p121 = pneg %p59
        $region14: #{tpu_custom_call.1} parent=11 // pred_check_branch
          %123 = sbr.rel (%p121) target = $region16
        $region15: #{tpu_custom_call.1} parent=11 // pred_region
          _
        $region16: #{tpu_custom_call.1} parent=11 // pred_fallthru
          _
        // Predicated region
        $region17: #{tpu_custom_call.1} parent=11 // pred_check
          %p124 = pneg %p80
        $region18: #{tpu_custom_call.1} parent=11 // pred_check_branch
          %126 = sbr.rel (%p124) target = $region20
        $region19: #{tpu_custom_call.1} parent=11 // pred_region
          _
        $region20: #{tpu_custom_call.1} parent=11 // pred_fallthru
          _
      $region12: #{tpu_custom_call.1} parent=5 // pred_fallthru
        _
      %p127 = scmp.lt.s32.totalorder %s12, 2
      // Predicated region
      $region21: #{tpu_custom_call.1} parent=5 // pred_check
        %p128 = pneg %p127
      $region22: #{tpu_custom_call.1} parent=5 // pred_check_branch
        %130 = sbr.rel (%p128) target = $region24
      $region23: #{tpu_custom_call.1} parent=5 // pred_region
        // Predicated region
        $region25: #{tpu_custom_call.1} parent=23 // pred_check
          %p131 = pneg %p32
        $region26: #{tpu_custom_call.1} parent=23 // pred_check_branch
          %133 = sbr.rel (%p131) target = $region28
        $region27: #{tpu_custom_call.1} parent=23 // pred_region
          %p134 = scmp.lt.s32.totalorder %s12, 1
          %s135 = scalar_select %p134, %s12, 1
          %s136 = smul.addr %s135, 14
          %s137 = smul.addr %s136, 8
          %s138 = scalar_lea.vmem %s0, %s137
        $region28: #{tpu_custom_call.1} parent=23 // pred_fallthru
          _
      $region24: #{tpu_custom_call.1} parent=5 // pred_fallthru
        _
      %p139 = scmp.le.s32.totalorder 1, %s12
      %p140 = scmp.lt.s32.totalorder %s12, 3
      %p141 = pnand %p139, %p140
      %p142 = pneg %p141
      // Predicated region
      $region29: #{tpu_custom_call.1} parent=5 // pred_check
        _
      $region30: #{tpu_custom_call.1} parent=5 // pred_check_branch
        %144 = sbr.rel (%p141) target = $region32
      $region31: #{tpu_custom_call.1} parent=5 // pred_region
        %s145 = ssub.s32 %s12, 1
        %p146 = scmp.lt.s32.totalorder %s17, 1
        %s147 = scalar_select %p146, %s17, 1
        %s148 = smul.addr %s147, 14
        %s149 = smul.addr %s148, 8
        %s150 = scalar_lea.vmem %s0, %s149
        %p151 = pneg %p38
        %p152 = pneg %p35
        %p153 = pneg %p59
        %p154 = pneg %p56
        %p155 = pneg %p80
        %p156 = pneg %p77
        %p157 = pneg %p106
        %p158 = pneg %p103
        %s159 = sand.u32 %s93, 1
        %s160 = scalar_lea.sflag [#allocation3], %s159
        %s161 = sand.u32 %s93, 1
        %s162 = smul.addr %s161, 32
        %s163 = scalar_lea.vmem [#allocation2], %s162
        %p164 = scmp.lt.s32.totalorder %s17, 1
        %s165 = scalar_select %p164, %s17, 1
        %s166 = smul.addr %s165, 14
        %s167 = smul.addr %s166, 8
        %s168 = scalar_lea.vmem %s0, %s167
        %v169 = vld [vmem:[%s168] sm:$0xff]
        %v170 = vld [vmem:[%s168 + $0x8] sm:$0xff]
        %v171 = vld [vmem:[%s168 + $0x10] sm:$0xff]
        %v172 = vld [vmem:[%s168 + $0x18] sm:$0xff]
        %v173 = vld [vmem:[%s168 + $0x20] sm:$0xff]
        %v174 = vld [vmem:[%s168 + $0x28] sm:$0xff]
        %v175 = vld [vmem:[%s168 + $0x30] sm:$0xff]
        %v176 = vld [vmem:[%s168 + $0x38] sm:$0xff]
        %v177 = vld [vmem:[%s168 + $0x40] sm:$0xff]
        %v178 = vld [vmem:[%s168 + $0x48] sm:$0xff]
        %v179 = vld [vmem:[%s168 + $0x50] sm:$0xff]
        %v180 = vld [vmem:[%s168 + $0x58] sm:$0xff]
        %v181 = vld [vmem:[%s168 + $0x60] sm:$0x1]
        %v182 = vld [vmem:[%s168 + $0x68] sm:$0x1]
        %v183 = vld [vmem:[%s1] sm:$0xff]
        %v184 = vld [vmem:[%s1 + $0x8] sm:$0xff]
        %v185 = vld [vmem:[%s2] sm:$0xff]
        %v186 = vld [vmem:[%s2 + $0x8] sm:$0xff]
        %188 = vset.pattern.permute.xlu0 0
        %189 = vperm.xlu0 %188, %v185
        %v190 = vpop.permute.xlu0 %189
        %193 = vset.pattern.permute.xlu0 0
        %194 = vperm.xlu0 %193, %v186
        %v195 = vpop.permute.xlu0 %194
        %vm197 = vcmask 400384
        %v199 = vsel %vm197, %v183, 0
        %v202 = vsel %vm197, %v184, 0
        %vm204 = vcmask 1040384
        %v206 = vsel %vm204, %v181, 0
        %v209 = vsel %vm204, %v182, 0
        %211 = vmatprep.subr.mxu0 %v170
        %212 = vmatpush1.msra.mxu0 %v169
        %213 = vmatprep.subr.mxu0 %v172
        %214 = vmatpush1.msra.mxu0 %v171
        %215 = vmatprep.subr.mxu0 %v174
        %216 = vmatpush1.msra.mxu0 %v173
        %217 = vmatprep.subr.mxu0 %v176
        %218 = vmatpush1.msra.mxu0 %v175
        %219 = vmatprep.subr.mxu0 %v178
        %220 = vmatpush1.msra.mxu0 %v177
        %221 = vmatprep.subr.mxu0 %v180
        %222 = vmatpush1.msra.mxu0 %v179
        %223 = vmatprep.subr.mxu0 %v209
        %224 = vmatpush1.msra.mxu0 %v206
        %225 = vmatprep.subr.mxu0 0.0
        %226 = vmatpush1.msra.mxu0 0.0
        %227 = vmatprep.subr.mxu0 0.0
        %228 = vmatpush1.msra.mxu0 0.0
        %229 = vmatprep.subr.mxu0 0.0
        %230 = vmatpush1.msra.mxu0 0.0
        %231 = vmatprep.subr.mxu0 0.0
        %232 = vmatpush1.msra.mxu0 0.0
        %233 = vmatprep.subr.mxu0 0.0
        %234 = vmatpush1.msra.mxu0 0.0
        %235 = vmatprep.subr.mxu0 0.0
        %236 = vmatpush1.msra.mxu0 0.0
        %237 = vmatprep.subr.mxu0 0.0
        %238 = vmatpush1.msra.mxu0 0.0
        %239 = vmatprep.subr.mxu0 0.0
        %240 = vmatpush1.msra.mxu0 0.0
        %241 = vmatprep.subr.mxu0 0.0
        %242 = vmatpush1.msra.mxu0 0.0
        %243 = vmatprep.subr.mxu0 0.0
        %244 = vmatpush1.msra.mxu0 0.0
        %245 = vmatprep.subr.mxu0 0.0
        %246 = vmatpush1.msra.mxu0 0.0
        %247 = vmatprep.subr.mxu0 0.0
        %248 = vmatpush1.msra.mxu0 0.0
        %249 = vmatprep.subr.mxu0 0.0
        %250 = vmatpush1.msra.mxu0 0.0
        %251 = vmatprep.subr.mxu0 0.0
        %252 = vmatpush1.msra.mxu0 0.0
        %253 = vmatprep.subr.mxu0 0.0
        %254 = vmatpush1.msra.mxu0 0.0
        %255 = vmatprep.subr.mxu0 0.0
        %256 = vmatpush1.msra.mxu0 0.0
        %257 = vmatprep.subr.mxu0 0.0
        %258 = vmatpush1.msra.mxu0 0.0
        %259 = vmatprep.subr.mxu0 0.0
        %260 = vmatpush1.msra.mxu0 0.0
        %261 = vmatprep.subr.mxu0 0.0
        %262 = vmatpush1.msra.mxu0 0.0
        %263 = vmatprep.subr.mxu0 0.0
        %264 = vmatpush1.msra.mxu0 0.0
        %265 = vmatprep.subr.mxu0 0.0
        %266 = vmatpush1.msra.mxu0 0.0
        %267 = vmatprep.subr.mxu0 0.0
        %268 = vmatpush1.msra.mxu0 0.0
        %269 = vmatprep.subr.mxu0 0.0
        %270 = vmatpush1.msra.mxu0 0.0
        %271 = vmatprep.subr.mxu0 0.0
        %272 = vmatpush1.msra.mxu0 0.0
        %273 = vmatprep.subr.mxu0 0.0
        %274 = vmatpush1.msra.mxu0 0.0
        %275 = vmatprep.mubr.f32.mxu0 0.0
        %276 = vmatmul.mubr.f32.gmra.mrb[0].mxu0 %v199
        %v277 = vpop.f32.mrb[0].mxu0
        %v278 = vadd.f32 %v190, %v277
        %v279 = vpop.f32.mrb[0].mxu0
        %v280 = vadd.f32 %v190, %v279
        %281 = vmatprep.mubr.f32.mxu0 0.0
        %282 = vmatmul.mubr.f32.gmra.mrb[0].mxu0 %v202
        %v283 = vpop.f32.mrb[0].mxu0
        %v284 = vadd.f32 %v195, %v283
        %v285 = vpop.f32.mrb[0].mxu0
        %v286 = vadd.f32 %v195, %v285
        %287 = vdwg.mxu0
        %v288 = vadd.f32 %v278, %v280
        %289 = vadd.xlane.f32.xlu0 %v288
        %v290 = vpop.xlane.xlu0 %289
        %v291 = vadd.f32 %v284, %v286
        %292 = vadd.xlane.f32.xlu0 %v291
        %v293 = vpop.xlane.xlu0 %292
        %v294 = vrcp.pop 256.0
        %v295 = vmul.f32 %v290, %v294
        %v296 = vmul.f32 %v293, %v294
        %v297 = vsub.f32 %v278, %v295
        %v298 = vsub.f32 %v280, %v295
        %v299 = vsub.f32 %v284, %v296
        %v300 = vsub.f32 %v286, %v296
        %v301 = vmul.f32 %v297, %v297
        %v302 = vmul.f32 %v298, %v298
        %v303 = vmul.f32 %v299, %v299
        %v304 = vmul.f32 %v300, %v300
        %v305 = vadd.f32 %v301, %v302
        %306 = vadd.xlane.f32.xlu0 %v305
        %v307 = vpop.xlane.xlu0 %306
        %v308 = vadd.f32 %v303, %v304
        %309 = vadd.xlane.f32.xlu0 %v308
        %v310 = vpop.xlane.xlu0 %309
        %v311 = vmul.f32 %v307, %v294
        %v312 = vmul.f32 %v310, %v294
        %v313 = vadd.f32 %v311, 1e-05
        %v314 = vadd.f32 %v312, 1e-05
        %v315 = vrsqrt.pop %v313
        %v316 = vrsqrt.pop %v314
        %v317 = vmul.f32 %v297, %v315
        %v318 = vmul.f32 %v298, %v315
        %v319 = vmul.f32 %v299, %v316
        %v320 = vmul.f32 %v300, %v316
        %v321 = vmax.f32 %v317, 0.0
        %v322 = vmax.f32 %v318, 0.0
        %v323 = vmax.f32 %v319, 0.0
        %v324 = vmax.f32 %v320, 0.0
        %325 = vst [vmem:[%s163] sm:$0xff] %v321
        %326 = vst [vmem:[%s163 + $0x8] sm:$0xff] %v322
        %327 = vst [vmem:[%s163 + $0x10] sm:$0xff] %v323
        %328 = vst [vmem:[%s163 + $0x18] sm:$0xff] %v324
        %s329 = sand.u32 %s93, 1
        %s330 = scalar_lea.sflag [#allocation3], %s329
        %s331 = sand.u32 %s93, 1
        %s332 = smul.addr %s331, 32
        %s333 = scalar_lea.vmem [#allocation2], %s332
        // Predicated region
        $region33: #{tpu_custom_call.1} parent=31 // pred_check
          %p334 = pneg %p103
        $region34: #{tpu_custom_call.1} parent=31 // pred_check_branch
          %336 = sbr.rel (%p334) target = $region36
        $region35: #{tpu_custom_call.1} parent=31 // pred_region
          %s338 = ssub.s32 512, 512
          %339 = vsyncadd %s330, %s338
          %s340 = smul.addr %s17, 4
          %s341 = smul.addr %s340, 128
          %s342 = scalar_lea.hbm %s3, %s341
          %s343 = sshll.u32 %s333, 4
          %s344 = int_to_ptr.vmem [resolvable:$true] %s343
          %349 = dma.vmem_to_hbm [thread:$0]  %s344, 512, %s342, %s330, 256, 256, 16
        $region36: #{tpu_custom_call.1} parent=31 // pred_fallthru
          _
      $region32: #{tpu_custom_call.1} parent=5 // pred_fallthru
        _
      %p350 = scmp.le.s32.totalorder 2, %s12
      // Predicated region
      $region37: #{tpu_custom_call.1} parent=5 // pred_check
        %p351 = pneg %p350
      $region38: #{tpu_custom_call.1} parent=5 // pred_check_branch
        %353 = sbr.rel (%p351) target = $region40
      $region39: #{tpu_custom_call.1} parent=5 // pred_region
        %s354 = ssub.s32 %s12, 2
        // Predicated region
        $region41: #{tpu_custom_call.1} parent=39 // pred_check
          %p355 = pneg %p109
        $region42: #{tpu_custom_call.1} parent=39 // pred_check_branch
          %357 = sbr.rel (%p355) target = $region44
        $region43: #{tpu_custom_call.1} parent=39 // pred_region
          %s358 = sand.u32 %s94, 1
          %s359 = scalar_lea.sflag [#allocation3], %s358
          %s360 = sand.u32 %s94, 1
          %s361 = smul.addr %s360, 32
          %s362 = scalar_lea.vmem [#allocation2], %s361
          %363 = dma.done %s359, 512
        $region44: #{tpu_custom_call.1} parent=39 // pred_fallthru
          _
      $region40: #{tpu_custom_call.1} parent=5 // pred_fallthru
        _
    $region6: #{tpu_custom_call.1} parent=1 // loop_footer
      %s16 = sadd.s32 1, %s12
    $region7: #{tpu_custom_call.1} parent=1 // loop_footer_branch
      %11 = sbr.rel target = $region3
    $region8: #{tpu_custom_call.1} parent=1 // loop_exit
      _
    %364 = vsyncpa [#allocation3], 1
    %s365 = scalar_lea.sflag [#allocation3], 1
    %366 = vsyncpa %s365, 1

</llo_original>
